<compile_context>
chip_gen: v6e
topology: v6e:2x2x1
jax: 0.10.0
libtpu: 0.0.40
codegen_flags: <defaults>
</compile_context>

<pallas_src>
import jax
import jax.numpy as jnp
import numpy as np
from jax.experimental import pallas as pl
from jax.experimental.pallas import tpu as pltpu


def _decay_kernel(inv_ref, x_ref, o_ref, scr_ref):
    """Processes one (bt, T, ht) block in the native (batch, seq, hidden) layout.

    inv_ref: (1, T, 1)    f32 VMEM -- precomputed 1 / (fn[t] + bn[t]).
    x_ref:   (bt, T, ht)  f32 VMEM -- input block.
    o_ref:   (bt, T, ht)  f32 VMEM -- output block (holds fwd partials between scans).
    scr_ref: (bt, 2T, ht) f32 VMEM -- zero-halo scratch: shifted reads become
             static sublane-offset slices of this buffer.
    """
    bt, T, ht = x_ref.shape
    zeros = jnp.zeros((bt, T, ht), jnp.float32)

    # ---- forward scan: fwd[t] = sum_{k<=t} 0.5^(t-k) x[k] (Hillis-Steele) ----
    # scratch rows [0, T) stay zero, rows [T, 2T) hold the current partials;
    # shift-down-by-s is then the static slice scr[:, T-s : 2T-s, :].
    scr_ref[:, :T, :] = zeros
    y = x_ref[...]
    s = 1
    while s < T:
        scr_ref[:, T:, :] = y
        y = y + jnp.float32(0.5 ** s) * scr_ref[:, T - s:2 * T - s, :]
        s *= 2
    o_ref[...] = y                     # park forward partials in the output block

    # ---- backward scan fused with combine + normalization -------------------
    # scratch rows [T, 2T) stay zero, rows [0, T) hold the current partials;
    # shift-up-by-s is the static slice scr[:, s : T+s, :].
    scr_ref[:, T:, :] = zeros
    z = x_ref[...]
    s = 1
    while s < T:
        scr_ref[:, :T, :] = z
        z = z + jnp.float32(0.5 ** s) * scr_ref[:, s:T + s, :]
        s *= 2
    o_ref[...] = (o_ref[...] + z) * inv_ref[...]


def _choose_tiles(B, T, H, target_block_bytes=2 * 1024 * 1024):
    """Pick (bt, ht) for (bt, T, ht) f32 blocks of a (B, T, H) array.

    The last two block dims are (T, ht): T is always the full sequence (the
    scan needs it whole) and ht is either a multiple-of-128 divisor of H or the
    full H (allowed when H is not 128-aligned).  bt grows toward the block-size
    target; the grid is kept >= 2 steps when possible (v7x dual TensorCore).
    """
    ht = H
    if H % 128 == 0:
        # Shrink by halving while staying a multiple of 128 (handles 384, 640,
        # 1536, ... via the 128 fallback below).
        while ht > 128 and (ht // 2) % 128 == 0 and T * ht * 4 > target_block_bytes:
            ht //= 2
        if ht > 128 and T * ht * 4 > target_block_bytes:
            ht = 128
    bt = 1
    while B % (bt * 2) == 0 and T * (bt * 2) * ht * 4 <= target_block_bytes:
        bt *= 2
    # Guarantee >= 2 grid steps along a "parallel" axis when the shapes allow,
    # so both v7x TensorCores get work.
    if (B // bt) * (H // ht) < 2:
        if ht % 256 == 0:
            ht //= 2
        elif bt > 1:
            bt //= 2
    return bt, ht


def _decay_pallas(x, inv_norm):
    """x: (B, T, H) f32, inv_norm: (1, T, 1) f32 -> (B, T, H) f32."""
    B, T, H = x.shape
    bt, ht = _choose_tiles(B, T, H)
    block_bytes = bt * T * ht * 4

    # Resident VMEM ~= 2x double-buffered input + 2x output blocks + the
    # 2x-block zero-halo scratch + live values during the log-step scans.
    # Keep the limit comfortably under v7x's 64 MiB physical VMEM.
    vmem_limit = int(min(max(12 * block_bytes + (2 << 20), 32 << 20), 48 << 20))
    # TODO(synk): for very long sequences (where even a (1, T, 128) block busts
    # the VMEM budget) add a T-blocked two-pass variant with a cross-grid-step
    # carry (forward pass, then a reversed-index backward/combine pass).

    grid = (B // bt, H // ht)
    return pl.pallas_call(
        _decay_kernel,
        out_shape=jax.ShapeDtypeStruct((B, T, H), jnp.float32),
        grid=grid,
        in_specs=[
            pl.BlockSpec((1, T, 1), lambda b, h: (0, 0, 0)),       # inv_norm
            pl.BlockSpec((bt, T, ht), lambda b, h: (b, 0, h)),     # x
        ],
        out_specs=pl.BlockSpec((bt, T, ht), lambda b, h: (b, 0, h)),
        scratch_shapes=[pltpu.VMEM((bt, 2 * T, ht), jnp.float32)],
        compiler_params=pltpu.CompilerParams(
            dimension_semantics=("parallel", "parallel"),
            vmem_limit_bytes=vmem_limit,
        ),
        cost_estimate=pl.CostEstimate(
            flops=4 * max(1, (T - 1).bit_length()) * B * T * H,
            transcendentals=0,
            bytes_accessed=8 * B * T * H,
        ),
    )(inv_norm, x)


@jax.jit
def decay_model_forward(batch):
    """PyTorch-compatible entry point. batch: (B, T, H); returns (B, T, H) f32.

    Works directly in the (batch, seq, hidden) layout -- no transposes anywhere.
    """
    x = batch.astype(jnp.float32)
    _, T, _ = x.shape
    # Closed-form normalization: fn[t] + bn[t] = 4 - 0.5**t - 0.5**(T-1-t).
    t = np.arange(T, dtype=np.float64)
    inv_norm = jnp.asarray(
        (1.0 / (4.0 - 0.5 ** t - 0.5 ** (T - 1 - t))).astype(np.float32)
    ).reshape(1, T, 1)
    return _decay_pallas(x, inv_norm)


def _reference_numpy(batch):
    """Direct transcription of the PyTorch forward loop."""
    batch = np.asarray(batch, dtype=np.float32)
    B, T, H = batch.shape
    fwd = np.zeros_like(batch)
    bwd = np.zeros_like(batch)
    fn = np.zeros((T,), dtype=np.float32)
    bn = np.zeros((T,), dtype=np.float32)
    decay = np.float32(0.5)
    for i in range(T):
        if i == 0:
            fwd[:, i, :] = batch[:, i, :]
            bwd[:, T - 1, :] = batch[:, T - 1, :]
            fn[i] = 1.0
            bn[T - 1] = 1.0
        else:
            fwd[:, i, :] = fwd[:, i - 1, :] * decay + batch[:, i, :]
            bwd[:, T - i - 1, :] = bwd[:, T - i, :] * decay + batch[:, T - i - 1, :]
            fn[i] = fn[i - 1] * decay + 1.0
            bn[T - i - 1] = bn[T - i] * decay + 1.0
    norm = (fn + bn)[None, :, None]
    return (fwd + bwd) / norm


if __name__ == "__main__":
    k1, k2 = jax.random.split(jax.random.PRNGKey(0))

    # Small shape consistent with the module (a batch of word embeddings).
    B, T, H = 2, 8, 32
    batch = jax.random.normal(k1, (B, T, H), dtype=jnp.float32)
    out = jax.block_until_ready(decay_model_forward(batch))
    ref = _reference_numpy(np.asarray(batch))
    np.testing.assert_allclose(np.asarray(out), ref, rtol=1e-5, atol=1e-6)

    # A second, lane-dense tile configuration (H multiple of 128).
    B2, T2, H2 = 4, 16, 128
    batch2 = jax.random.normal(k2, (B2, T2, H2), dtype=jnp.float32)
    out2 = jax.block_until_ready(decay_model_forward(batch2))
    ref2 = _reference_numpy(np.asarray(batch2))
    np.testing.assert_allclose(np.asarray(out2), ref2, rtol=1e-5, atol=1e-6)

    print("KERNEL_OK")
</pallas_src>

<mosaic_0001>
module attributes {stable_mosaic.version = 11 : i64} {
  func.func @_decay_kernel(%arg0: i32, %arg1: i32, %arg2: memref<1x8x1xf32, #tpu.memory_space<vmem>>, %arg3: memref<1x8x32xf32, #tpu.memory_space<vmem>>, %arg4: memref<1x8x32xf32, #tpu.memory_space<vmem>>, %arg5: memref<1x16x32xf32, #tpu.memory_space<vmem>>) attributes {dimension_semantics = [#tpu.dimension_semantics<parallel>, #tpu.dimension_semantics<parallel>], iteration_bounds = array<i64: 2, 1>, scalar_prefetch = 0 : i64, scratch_operands = 1 : i64, tpu.core_type = #tpu.core_type<tc>, window_params = [{pipeline_mode = #tpu.pipeline_mode<synchronous>, transform_indices = @transform_0, window_bounds = array<i64: 1, 8, 1>}, {transform_indices = @transform_1, window_bounds = array<i64: 1, 8, 32>}, {transform_indices = @transform_2, window_bounds = array<i64: 1, 8, 32>}]} {
    %cst = arith.constant 0.000000e+00 : f32
    %0 = vector.broadcast %cst : f32 to vector<1x8x32xf32>
    %c0 = arith.constant 0 : index
    %c0_0 = arith.constant 0 : index
    %c0_1 = arith.constant 0 : index
    %1 = vector.load %arg5[%c0, %c0_0, %c0_1] : memref<1x16x32xf32, #tpu.memory_space<vmem>>, vector<1x8x32xf32>
    tpu.vector_store %arg5[%c0, %c0_0, %c0_1], %0 {strides = array<i32>} : memref<1x16x32xf32, #tpu.memory_space<vmem>>, vector<1x8x32xf32>,
    %c0_2 = arith.constant 0 : index
    %c0_3 = arith.constant 0 : index
    %c0_4 = arith.constant 0 : index
    %2 = vector.load %arg3[%c0_2, %c0_3, %c0_4] : memref<1x8x32xf32, #tpu.memory_space<vmem>>, vector<1x8x32xf32>
    %c0_5 = arith.constant 0 : index
    %c8 = arith.constant 8 : index
    %c0_6 = arith.constant 0 : index
    %3 = vector.load %arg5[%c0_5, %c8, %c0_6] : memref<1x16x32xf32, #tpu.memory_space<vmem>>, vector<1x8x32xf32>
    tpu.vector_store %arg5[%c0_5, %c8, %c0_6], %2 {strides = array<i32>} : memref<1x16x32xf32, #tpu.memory_space<vmem>>, vector<1x8x32xf32>,
    %c0_7 = arith.constant 0 : index
    %c7 = arith.constant 7 : index
    %c0_8 = arith.constant 0 : index
    %4 = vector.load %arg5[%c0_7, %c7, %c0_8] : memref<1x16x32xf32, #tpu.memory_space<vmem>>, vector<1x8x32xf32>
    %cst_9 = arith.constant 5.000000e-01 : f32
    %5 = vector.broadcast %cst_9 : f32 to vector<1x8x32xf32>
    %6 = arith.mulf %5, %4 : vector<1x8x32xf32>
    %7 = arith.addf %2, %6 : vector<1x8x32xf32>
    %c0_10 = arith.constant 0 : index
    %c8_11 = arith.constant 8 : index
    %c0_12 = arith.constant 0 : index
    %8 = vector.load %arg5[%c0_10, %c8_11, %c0_12] : memref<1x16x32xf32, #tpu.memory_space<vmem>>, vector<1x8x32xf32>
    tpu.vector_store %arg5[%c0_10, %c8_11, %c0_12], %7 {strides = array<i32>} : memref<1x16x32xf32, #tpu.memory_space<vmem>>, vector<1x8x32xf32>,
    %c0_13 = arith.constant 0 : index
    %c6 = arith.constant 6 : index
    %c0_14 = arith.constant 0 : index
    %9 = vector.load %arg5[%c0_13, %c6, %c0_14] : memref<1x16x32xf32, #tpu.memory_space<vmem>>, vector<1x8x32xf32>
    %cst_15 = arith.constant 2.500000e-01 : f32
    %10 = vector.broadcast %cst_15 : f32 to vector<1x8x32xf32>
    %11 = arith.mulf %10, %9 : vector<1x8x32xf32>
    %12 = arith.addf %7, %11 : vector<1x8x32xf32>
    %c0_16 = arith.constant 0 : index
    %c8_17 = arith.constant 8 : index
    %c0_18 = arith.constant 0 : index
    %13 = vector.load %arg5[%c0_16, %c8_17, %c0_18] : memref<1x16x32xf32, #tpu.memory_space<vmem>>, vector<1x8x32xf32>
    tpu.vector_store %arg5[%c0_16, %c8_17, %c0_18], %12 {strides = array<i32>} : memref<1x16x32xf32, #tpu.memory_space<vmem>>, vector<1x8x32xf32>,
    %c0_19 = arith.constant 0 : index
    %c4 = arith.constant 4 : index
    %c0_20 = arith.constant 0 : index
    %14 = vector.load %arg5[%c0_19, %c4, %c0_20] : memref<1x16x32xf32, #tpu.memory_space<vmem>>, vector<1x8x32xf32>
    %cst_21 = arith.constant 6.250000e-02 : f32
    %15 = vector.broadcast %cst_21 : f32 to vector<1x8x32xf32>
    %16 = arith.mulf %15, %14 : vector<1x8x32xf32>
    %17 = arith.addf %12, %16 : vector<1x8x32xf32>
    %c0_22 = arith.constant 0 : index
    %c0_23 = arith.constant 0 : index
    %c0_24 = arith.constant 0 : index
    %18 = vector.load %arg4[%c0_22, %c0_23, %c0_24] : memref<1x8x32xf32, #tpu.memory_space<vmem>>, vector<1x8x32xf32>
    tpu.vector_store %arg4[%c0_22, %c0_23, %c0_24], %17 {strides = array<i32>} : memref<1x8x32xf32, #tpu.memory_space<vmem>>, vector<1x8x32xf32>,
    %c0_25 = arith.constant 0 : index
    %c8_26 = arith.constant 8 : index
    %c0_27 = arith.constant 0 : index
    %19 = vector.load %arg5[%c0_25, %c8_26, %c0_27] : memref<1x16x32xf32, #tpu.memory_space<vmem>>, vector<1x8x32xf32>
    tpu.vector_store %arg5[%c0_25, %c8_26, %c0_27], %0 {strides = array<i32>} : memref<1x16x32xf32, #tpu.memory_space<vmem>>, vector<1x8x32xf32>,
    %c0_28 = arith.constant 0 : index
    %c0_29 = arith.constant 0 : index
    %c0_30 = arith.constant 0 : index
    %20 = vector.load %arg3[%c0_28, %c0_29, %c0_30] : memref<1x8x32xf32, #tpu.memory_space<vmem>>, vector<1x8x32xf32>
    %c0_31 = arith.constant 0 : index
    %c0_32 = arith.constant 0 : index
    %c0_33 = arith.constant 0 : index
    %21 = vector.load %arg5[%c0_31, %c0_32, %c0_33] : memref<1x16x32xf32, #tpu.memory_space<vmem>>, vector<1x8x32xf32>
    tpu.vector_store %arg5[%c0_31, %c0_32, %c0_33], %20 {strides = array<i32>} : memref<1x16x32xf32, #tpu.memory_space<vmem>>, vector<1x8x32xf32>,
    %c0_34 = arith.constant 0 : index
    %c1 = arith.constant 1 : index
    %c0_35 = arith.constant 0 : index
    %22 = vector.load %arg5[%c0_34, %c1, %c0_35] : memref<1x16x32xf32, #tpu.memory_space<vmem>>, vector<1x8x32xf32>
    %cst_36 = arith.constant 5.000000e-01 : f32
    %23 = vector.broadcast %cst_36 : f32 to vector<1x8x32xf32>
    %24 = arith.mulf %23, %22 : vector<1x8x32xf32>
    %25 = arith.addf %20, %24 : vector<1x8x32xf32>
    %c0_37 = arith.constant 0 : index
    %c0_38 = arith.constant 0 : index
    %c0_39 = arith.constant 0 : index
    %26 = vector.load %arg5[%c0_37, %c0_38, %c0_39] : memref<1x16x32xf32, #tpu.memory_space<vmem>>, vector<1x8x32xf32>
    tpu.vector_store %arg5[%c0_37, %c0_38, %c0_39], %25 {strides = array<i32>} : memref<1x16x32xf32, #tpu.memory_space<vmem>>, vector<1x8x32xf32>,
    %c0_40 = arith.constant 0 : index
    %c2 = arith.constant 2 : index
    %c0_41 = arith.constant 0 : index
    %27 = vector.load %arg5[%c0_40, %c2, %c0_41] : memref<1x16x32xf32, #tpu.memory_space<vmem>>, vector<1x8x32xf32>
    %cst_42 = arith.constant 2.500000e-01 : f32
    %28 = vector.broadcast %cst_42 : f32 to vector<1x8x32xf32>
    %29 = arith.mulf %28, %27 : vector<1x8x32xf32>
    %30 = arith.addf %25, %29 : vector<1x8x32xf32>
    %c0_43 = arith.constant 0 : index
    %c0_44 = arith.constant 0 : index
    %c0_45 = arith.constant 0 : index
    %31 = vector.load %arg5[%c0_43, %c0_44, %c0_45] : memref<1x16x32xf32, #tpu.memory_space<vmem>>, vector<1x8x32xf32>
    tpu.vector_store %arg5[%c0_43, %c0_44, %c0_45], %30 {strides = array<i32>} : memref<1x16x32xf32, #tpu.memory_space<vmem>>, vector<1x8x32xf32>,
    %c0_46 = arith.constant 0 : index
    %c4_47 = arith.constant 4 : index
    %c0_48 = arith.constant 0 : index
    %32 = vector.load %arg5[%c0_46, %c4_47, %c0_48] : memref<1x16x32xf32, #tpu.memory_space<vmem>>, vector<1x8x32xf32>
    %cst_49 = arith.constant 6.250000e-02 : f32
    %33 = vector.broadcast %cst_49 : f32 to vector<1x8x32xf32>
    %34 = arith.mulf %33, %32 : vector<1x8x32xf32>
    %35 = arith.addf %30, %34 : vector<1x8x32xf32>
    %c0_50 = arith.constant 0 : index
    %c0_51 = arith.constant 0 : index
    %c0_52 = arith.constant 0 : index
    %36 = vector.load %arg4[%c0_50, %c0_51, %c0_52] : memref<1x8x32xf32, #tpu.memory_space<vmem>>, vector<1x8x32xf32>
    %37 = arith.addf %36, %35 : vector<1x8x32xf32>
    %c0_53 = arith.constant 0 : index
    %c0_54 = arith.constant 0 : index
    %c0_55 = arith.constant 0 : index
    %38 = vector.load %arg2[%c0_53, %c0_54, %c0_55] : memref<1x8x1xf32, #tpu.memory_space<vmem>>, vector<1x8x1xf32>
    %39 = vector.broadcast %38 : vector<1x8x1xf32> to vector<1x8x32xf32>
    %40 = arith.mulf %37, %39 : vector<1x8x32xf32>
    %c0_56 = arith.constant 0 : index
    %c0_57 = arith.constant 0 : index
    %c0_58 = arith.constant 0 : index
    %41 = vector.load %arg4[%c0_56, %c0_57, %c0_58] : memref<1x8x32xf32, #tpu.memory_space<vmem>>, vector<1x8x32xf32>
    tpu.vector_store %arg4[%c0_56, %c0_57, %c0_58], %40 {strides = array<i32>} : memref<1x8x32xf32, #tpu.memory_space<vmem>>, vector<1x8x32xf32>,
    return
  }
  func.func @transform_0(%arg0: i32, %arg1: i32) -> (i32, i32, i32) {
    %c0_i32 = arith.constant 0 : i32
    %c0_i32_0 = arith.constant 0 : i32
    %c0_i32_1 = arith.constant 0 : i32
    %c0_i32_2 = arith.constant 0 : i32
    return %c0_i32, %c0_i32_0, %c0_i32_1 : i32, i32, i32
  }
  func.func @transform_1(%arg0: i32, %arg1: i32) -> (i32, i32, i32) {
    %c0_i32 = arith.constant 0 : i32
    %c0_i32_0 = arith.constant 0 : i32
    return %arg0, %c0_i32, %arg1 : i32, i32, i32
  }
  func.func @transform_2(%arg0: i32, %arg1: i32) -> (i32, i32, i32) {
    %c0_i32 = arith.constant 0 : i32
    %c0_i32_0 = arith.constant 0 : i32
    return %arg0, %c0_i32, %arg1 : i32, i32, i32
  }
}

</mosaic_0001>

<llo_original>
// kernel: decay_model_forward.1
$region0: #{decay_model_forward.1}
  #allocation0 [shape = 'u32[]', space=smem, size = 0x4, offset = 0x4, fixed_abs, tag = 'smem constant byte address 0x4 - core index']
  #allocation1 [shape = 'u32[144,128]{1,0:T(1,128)}', space=vmem, size = 0x12000, scoped, tag = 'internal scratch']
  #allocation2 [shape = 'f32[1,16,32]{2,1,0:T(8,128)}', space=vmem, size = 0x2000, scoped, tag = 'scratch operand']
  %s0 = inlined_call_operand.hbm [shape: f32[1,8,1], index: 0, kind: input, shape index: {}]
  %s1 = inlined_call_operand.hbm [shape: f32[2,8,32], index: 1, kind: input, shape index: {}]
  %s2 = inlined_call_operand.hbm [shape: f32[2,8,32], index: 2, kind: output, shape index: {}]
  %s3 = sld [smem:[#allocation0]]
  $region49: #{decay_model_forward.1} parent=0
    _
  %s5 = ssub.s32 1, %s3
  %s6 = scalar_select 0, %s5, %s3
  $region1: #{decay_model_forward.1} parent=0
    #allocation3 [shape = 'u8[4096]{0}', space=vmem, size = 0x1000, scoped, tag = 'input window, operand 0, single buffered']
    #allocation4 [shape = 's32[2]{0}', space=sflag, size = 0x8, scoped, tag = 'scoped memory for decay_model_forward.1']
    #allocation5 [shape = 's32[2]{0}', space=sflag, size = 0x8, scoped, tag = 'scoped memory for decay_model_forward.1']
    #allocation6 [shape = 'u8[8192]{0}', space=vmem, size = 0x2000, scoped, tag = 'input window, operand 1']
    #allocation7 [shape = 's32[2]{0}', space=sflag, size = 0x8, scoped, tag = 'scoped memory for decay_model_forward.1']
    #allocation8 [shape = 'u8[8192]{0}', space=vmem, size = 0x2000, scoped, tag = 'output window, operand 0']
    %7 = vsyncpa [#allocation4], 0
    %8 = vsyncpa [#allocation7], 0
    %s9 = scalar_lea.sflag [#allocation7], 1
    %10 = vsyncpa %s9, 0
    %11 = vsyncpa [#allocation5], 0
    %s12 = scalar_lea.sflag [#allocation5], 1
    %13 = vsyncpa %s12, 0
    loop: start=0, step=1, limit=4
    $region2: #{decay_model_forward.1} parent=1 // loop_pre_header
      _
    $region3: #{decay_model_forward.1} parent=1 // loop_header
      %s15 = sphi 0, %s19
      %p16 = scmp.ge.s32.totalorder %s15, 4
      %s22 = sphi 0, %s34
      %s23 = sphi 0, %s30
      %s24 = sphi 0, %s22
      %s25 = sphi 0, %s23
      %s26 = sphi 0, %s24
      %s27 = sphi 0, %s25
      %s35 = sphi 0, %s35
      %s37 = sphi 0, %s35
      %s38 = sphi 0, %s37
      %s52 = sphi 0, %s38
      %s60 = sphi 0, %s62
      %s63 = sphi 0, %s60
      %s64 = sphi 0, %s63
      %s80 = sphi 0, %s64
      %s88 = sphi 0, %s90
      %s91 = sphi 0, %s88
      %s92 = sphi 0, %s91
      %s108 = sphi 0, %s92
    $region4: #{decay_model_forward.1} parent=1 // loop_header_branch
      %18 = sbr.rel (%p16) target = $region8
    $region5: #{decay_model_forward.1} parent=1 // loop_body
      %s20 = ssub.s32 %s15, 1
      %s21 = ssub.s32 %s15, 2
      %s28 = sadd.s32 1, %s23
      %p29 = scmp.ge.s32.totalorder %s28, 1
      %s30 = scalar_select %p29, 0, %s28
      %s31 = sadd.s32 1, %s22
      %s32 = scalar_select %p29, %s31, %s22
      %p33 = scmp.ge.s32.totalorder %s32, 2
      %s34 = scalar_select %p33, 0, %s32
      %s36 = sadd.s32 %s35, 1
      %p39 = scmp.eq.s32.totalorder %s15, 1
      %p40 = scmp.ne.s32.totalorder %s35, %s37
      %p41 = scmp.eq.s32.totalorder %s15, 0
      %p42 = por %p40, %p41
      %p43 = scmp.ne.s32.totalorder %s35, %s37
      %p44 = scmp.eq.s32.totalorder %s20, 1
      %p45 = por %p43, %p44
      %p46 = scmp.ne.s32.totalorder %s37, %s38
      %p47 = scmp.eq.s32.totalorder %s20, 0
      %p48 = por %p46, %p47
      %p49 = scmp.ne.s32.totalorder %s37, %s38
      %p50 = scmp.eq.s32.totalorder %s21, 1
      %p51 = por %p49, %p50
      %p53 = scmp.ne.s32.totalorder %s38, %s52
      %p54 = scmp.eq.s32.totalorder %s21, 0
      %p55 = por %p53, %p54
      %s56 = ssub.s32 %s22, %s34
      %s57 = ssub.s32 %s23, %s30
      %s58 = sor.u32 %s56, %s57
      %p59 = scmp.eq.s32.totalorder %s58, 0
      %s61 = sadd.s32 %s60, 1
      %s62 = scalar_select %p59, %s60, %s61
      %p65 = pneg %p59
      %p66 = scmp.eq.s32.totalorder %s15, 1
      %p67 = por %p65, %p66
      %p68 = scmp.ne.s32.totalorder %s60, %s63
      %p69 = scmp.eq.s32.totalorder %s15, 0
      %p70 = por %p68, %p69
      %p71 = scmp.ne.s32.totalorder %s60, %s63
      %p72 = scmp.eq.s32.totalorder %s20, 1
      %p73 = por %p71, %p72
      %p74 = scmp.ne.s32.totalorder %s63, %s64
      %p75 = scmp.eq.s32.totalorder %s20, 0
      %p76 = por %p74, %p75
      %p77 = scmp.ne.s32.totalorder %s63, %s64
      %p78 = scmp.eq.s32.totalorder %s21, 1
      %p79 = por %p77, %p78
      %p81 = scmp.ne.s32.totalorder %s64, %s80
      %p82 = scmp.eq.s32.totalorder %s21, 0
      %p83 = por %p81, %p82
      %s84 = ssub.s32 %s22, %s34
      %s85 = ssub.s32 %s23, %s30
      %s86 = sor.u32 %s84, %s85
      %p87 = scmp.eq.s32.totalorder %s86, 0
      %s89 = sadd.s32 %s88, 1
      %s90 = scalar_select %p87, %s88, %s89
      %p93 = pneg %p87
      %p94 = scmp.eq.s32.totalorder %s15, 1
      %p95 = por %p93, %p94
      %p96 = scmp.ne.s32.totalorder %s88, %s91
      %p97 = scmp.eq.s32.totalorder %s15, 0
      %p98 = por %p96, %p97
      %p99 = scmp.ne.s32.totalorder %s88, %s91
      %p100 = scmp.eq.s32.totalorder %s20, 1
      %p101 = por %p99, %p100
      %p102 = scmp.ne.s32.totalorder %s91, %s92
      %p103 = scmp.eq.s32.totalorder %s20, 0
      %p104 = por %p102, %p103
      %p105 = scmp.ne.s32.totalorder %s91, %s92
      %p106 = scmp.eq.s32.totalorder %s21, 1
      %p107 = por %p105, %p106
      %p109 = scmp.ne.s32.totalorder %s92, %s108
      %p110 = scmp.eq.s32.totalorder %s21, 0
      %p111 = por %p109, %p110
      %p112 = scmp.le.s32.totalorder 1, %s15
      %p113 = scmp.lt.s32.totalorder %s15, 3
      %p114 = pnand %p112, %p113
      %p115 = pneg %p114
      // Predicated region
      $region9: #{decay_model_forward.1} parent=5 // pred_check
        _
      $region10: #{decay_model_forward.1} parent=5 // pred_check_branch
        %117 = sbr.rel (%p114) target = $region12
      $region11: #{decay_model_forward.1} parent=5 // pred_region
        %s118 = ssub.s32 %s15, 1
        // Predicated region
        $region13: #{decay_model_forward.1} parent=11 // pred_check
          %p119 = pneg %p48
        $region14: #{decay_model_forward.1} parent=11 // pred_check_branch
          %121 = sbr.rel (%p119) target = $region16
        $region15: #{decay_model_forward.1} parent=11 // pred_region
          %s123 = ssub.s32 128, 128
          %124 = vsyncadd [#allocation4], %s123
          %s126 = sshll.u32 [#allocation3], 4
          %s127 = int_to_ptr.vmem [resolvable:$true] %s126
          %129 = dma.hbm_to_vmem [thread:$0]  %s0, 128, %s127, [#allocation4]
        $region16: #{decay_model_forward.1} parent=11 // pred_fallthru
          _
      $region12: #{decay_model_forward.1} parent=5 // pred_fallthru
        _
      %p130 = scmp.lt.s32.totalorder %s15, 2
      // Predicated region
      $region17: #{decay_model_forward.1} parent=5 // pred_check
        %p131 = pneg %p130
      $region18: #{decay_model_forward.1} parent=5 // pred_check_branch
        %133 = sbr.rel (%p131) target = $region20
      $region19: #{decay_model_forward.1} parent=5 // pred_region
        // Predicated region
        $region21: #{decay_model_forward.1} parent=19 // pred_check
          %p134 = pneg %p70
        $region22: #{decay_model_forward.1} parent=19 // pred_check_branch
          %136 = sbr.rel (%p134) target = $region24
        $region23: #{decay_model_forward.1} parent=19 // pred_region
          %s137 = sand.u32 %s60, 1
          %s138 = scalar_lea.sflag [#allocation7], %s137
          %s139 = sand.u32 %s60, 1
          %s140 = smul.addr %s139, 8
          %s141 = scalar_lea.vmem [#allocation6], %s140
          %s143 = ssub.s32 128, 128
          %144 = vsyncadd %s138, %s143
          %s145 = sadd.s32 %s23, %s22
          %s146 = smul.addr %s145, 128
          %s147 = scalar_lea.hbm %s1, %s146
          %s149 = sshll.u32 %s141, 4
          %s150 = int_to_ptr.vmem [resolvable:$true] %s149
          %152 = dma.hbm_to_vmem [thread:$0]  %s147, 128, %s150, %s138
        $region24: #{decay_model_forward.1} parent=19 // pred_fallthru
          _
      $region20: #{decay_model_forward.1} parent=5 // pred_fallthru
        _
      %p153 = scmp.le.s32.totalorder 1, %s15
      %p154 = scmp.lt.s32.totalorder %s15, 3
      %p155 = pnand %p153, %p154
      %p156 = pneg %p155
      // Predicated region
      $region25: #{decay_model_forward.1} parent=5 // pred_check
        _
      $region26: #{decay_model_forward.1} parent=5 // pred_check_branch
        %158 = sbr.rel (%p155) target = $region28
      $region27: #{decay_model_forward.1} parent=5 // pred_region
        %s159 = ssub.s32 %s15, 1
        // Predicated region
        $region29: #{decay_model_forward.1} parent=27 // pred_check
          %p160 = pneg %p48
        $region30: #{decay_model_forward.1} parent=27 // pred_check_branch
          %162 = sbr.rel (%p160) target = $region32
        $region31: #{decay_model_forward.1} parent=27 // pred_region
          %163 = dma.done [#allocation4], 128
        $region32: #{decay_model_forward.1} parent=27 // pred_fallthru
          _
        %s164 = sand.u32 %s63, 1
        %s165 = scalar_lea.sflag [#allocation7], %s164
        %s166 = sand.u32 %s63, 1
        %s167 = smul.addr %s166, 8
        %s168 = scalar_lea.vmem [#allocation6], %s167
        // Predicated region
        $region33: #{decay_model_forward.1} parent=27 // pred_check
          %p169 = pneg %p76
        $region34: #{decay_model_forward.1} parent=27 // pred_check_branch
          %171 = sbr.rel (%p169) target = $region36
        $region35: #{decay_model_forward.1} parent=27 // pred_region
          %172 = dma.done %s165, 128
        $region36: #{decay_model_forward.1} parent=27 // pred_fallthru
          _
        %p173 = pneg %p48
        %p174 = pneg %p45
        %s175 = sand.u32 %s63, 1
        %s176 = scalar_lea.sflag [#allocation7], %s175
        %s177 = sand.u32 %s63, 1
        %s178 = smul.addr %s177, 8
        %s179 = scalar_lea.vmem [#allocation6], %s178
        %p180 = pneg %p76
        %p181 = pneg %p73
        %p182 = pneg %p104
        %p183 = pneg %p101
        %s184 = sand.u32 %s91, 1
        %s185 = scalar_lea.sflag [#allocation5], %s184
        %s186 = sand.u32 %s91, 1
        %s187 = smul.addr %s186, 8
        %s188 = scalar_lea.vmem [#allocation8], %s187
        %vm189 = vcmask 261120
        %190 = vst.msk [vmem:[#allocation2] sm:$0xff] %vm189, 0.0
        %v191 = vld [vmem:[%s168] sm:$0xff]
        %192 = vst.msk [vmem:[#allocation2 + $0x8] sm:$0xff] %vm189, %v191
        %v193 = vld [vmem:[#allocation2 + $0x7] sm:$0xff]
        %v194 = vmul.f32 %v193, 0.5
        %v195 = vadd.f32 %v191, %v194
        %196 = vst.msk [vmem:[#allocation2 + $0x8] sm:$0xff] %vm189, %v195
        %v197 = vld [vmem:[#allocation2 + $0x6] sm:$0xff]
        %v198 = vmul.f32 %v197, 0.25
        %v199 = vadd.f32 %v195, %v198
        %200 = vst.msk [vmem:[#allocation2 + $0x8] sm:$0xff] %vm189, %v199
        %v201 = vld [vmem:[#allocation2 + $0x4] sm:$0xff]
        %v202 = vmul.f32 %v201, 0.0625
        %v203 = vadd.f32 %v199, %v202
        %204 = vst.msk [vmem:[%s188] sm:$0xff] %vm189, %v203
        %205 = vst.msk [vmem:[#allocation2 + $0x8] sm:$0xff] %vm189, 0.0
        %v206 = vld [vmem:[%s168] sm:$0xff]
        %207 = vst.msk [vmem:[#allocation2] sm:$0xff] %vm189, %v206
        %v208 = vld [vmem:[#allocation2 + $0x1] sm:$0xff]
        %v209 = vmul.f32 %v208, 0.5
        %v210 = vadd.f32 %v206, %v209
        %211 = vst.msk [vmem:[#allocation2] sm:$0xff] %vm189, %v210
        %v212 = vld [vmem:[#allocation2 + $0x2] sm:$0xff]
        %v213 = vmul.f32 %v212, 0.25
        %v214 = vadd.f32 %v210, %v213
        %215 = vst.msk [vmem:[#allocation2] sm:$0xff] %vm189, %v214
        %v216 = vld [vmem:[#allocation2 + $0x4] sm:$0xff]
        %v217 = vmul.f32 %v216, 0.0625
        %v218 = vadd.f32 %v214, %v217
        %v219 = vld [vmem:[%s188] sm:$0xff]
        %v220 = vadd.f32 %v219, %v218
        %v221 = vld [vmem:[#allocation3] sm:$0xff]
        %223 = vset.pattern.permute.xlu0 0
        %224 = vperm.xlu0 %223, %v221
        %v225 = vpop.permute.xlu0 %224
        %v227 = vmul.f32 %v220, %v225
        %228 = vst.msk [vmem:[%s188] sm:$0xff] %vm189, %v227
        %s229 = sand.u32 %s91, 1
        %s230 = scalar_lea.sflag [#allocation5], %s229
        %s231 = sand.u32 %s91, 1
        %s232 = smul.addr %s231, 8
        %s233 = scalar_lea.vmem [#allocation8], %s232
        // Predicated region
        $region37: #{decay_model_forward.1} parent=27 // pred_check
          %p234 = pneg %p101
        $region38: #{decay_model_forward.1} parent=27 // pred_check_branch
          %236 = sbr.rel (%p234) target = $region40
        $region39: #{decay_model_forward.1} parent=27 // pred_region
          %s238 = ssub.s32 128, 128
          %239 = vsyncadd %s230, %s238
          %s240 = sadd.s32 %s25, %s24
          %s241 = smul.addr %s240, 128
          %s242 = scalar_lea.hbm %s2, %s241
          %s244 = sshll.u32 %s233, 4
          %s245 = int_to_ptr.vmem [resolvable:$true] %s244
          %247 = dma.vmem_to_hbm [thread:$0]  %s245, 128, %s242, %s230
        $region40: #{decay_model_forward.1} parent=27 // pred_fallthru
          _
      $region28: #{decay_model_forward.1} parent=5 // pred_fallthru
        _
      %p248 = scmp.le.s32.totalorder 2, %s15
      // Predicated region
      $region41: #{decay_model_forward.1} parent=5 // pred_check
        %p249 = pneg %p248
      $region42: #{decay_model_forward.1} parent=5 // pred_check_branch
        %251 = sbr.rel (%p249) target = $region44
      $region43: #{decay_model_forward.1} parent=5 // pred_region
        %s252 = ssub.s32 %s15, 2
        // Predicated region
        $region45: #{decay_model_forward.1} parent=43 // pred_check
          %p253 = pneg %p107
        $region46: #{decay_model_forward.1} parent=43 // pred_check_branch
          %255 = sbr.rel (%p253) target = $region48
        $region47: #{decay_model_forward.1} parent=43 // pred_region
          %s256 = sand.u32 %s92, 1
          %s257 = scalar_lea.sflag [#allocation5], %s256
          %s258 = sand.u32 %s92, 1
          %s259 = smul.addr %s258, 8
          %s260 = scalar_lea.vmem [#allocation8], %s259
          %261 = dma.done %s257, 128
        $region48: #{decay_model_forward.1} parent=43 // pred_fallthru
          _
      $region44: #{decay_model_forward.1} parent=5 // pred_fallthru
        _
    $region6: #{decay_model_forward.1} parent=1 // loop_footer
      %s19 = sadd.s32 1, %s15
    $region7: #{decay_model_forward.1} parent=1 // loop_footer_branch
      %14 = sbr.rel target = $region3
    $region8: #{decay_model_forward.1} parent=1 // loop_exit
      _
    %262 = vsyncpa [#allocation4], 1
    %s263 = scalar_lea.sflag [#allocation4], 1
    %264 = vsyncpa %s263, 1
    %265 = vsyncpa [#allocation7], 1
    %s266 = scalar_lea.sflag [#allocation7], 1
    %267 = vsyncpa %s266, 1
    %268 = vsyncpa [#allocation5], 1
    %s269 = scalar_lea.sflag [#allocation5], 1
    %270 = vsyncpa %s269, 1

</llo_original>
